<compile_context>
chip_gen: v5e
topology: v5e:2x2
jax: 0.10.0
libtpu: 0.0.40
codegen_flags: <defaults>
</compile_context>

<pallas_src>
import functools
import math

import jax
import jax.numpy as jnp
from jax.experimental import pallas as pl
from jax.experimental.pallas import tpu as pltpu


def _round_up(x: int, m: int) -> int:
    return ((x + m - 1) // m) * m


# ---------------------------------------------------------------------------
# Kernel 1: support = X @ W   (computed once, tiled over node rows)
# ---------------------------------------------------------------------------
def _support_kernel(x_ref, w_ref, s_ref):
    s_ref[...] = jnp.dot(
        x_ref[...], w_ref[...], preferred_element_type=jnp.float32
    ).astype(s_ref.dtype)


# ---------------------------------------------------------------------------
# Kernel 2: out = adj @ support + bias   (row tiles x k tiles, f32 accumulator)
# ---------------------------------------------------------------------------
def _aggregate_kernel(adj_ref, s_ref, b_ref, o_ref, acc_ref):
    k = pl.program_id(1)

    @pl.when(k == 0)
    def _():
        # Fold the bias add into the accumulator initialization.
        acc_ref[...] = jnp.broadcast_to(b_ref[...].astype(jnp.float32),
                                        acc_ref.shape)

    acc_ref[...] += jnp.dot(
        adj_ref[...], s_ref[...], preferred_element_type=jnp.float32
    )

    @pl.when(k == pl.num_programs(1) - 1)
    def _():
        o_ref[...] = acc_ref[...].astype(o_ref.dtype)


@functools.partial(jax.jit, static_argnames=("row_tile", "k_tile"))
def graph_convolution(x, adj, weight, bias=None, *, row_tile=256, k_tile=2048):
    """Pallas GCN forward: adj @ (x @ weight) + bias."""
    n, in_dim = x.shape
    out_dim = weight.shape[1]
    assert adj.shape == (n, n)
    out_dtype = x.dtype

    # Lane-dense output width (multiple of 128 lanes).
    out_pad = _round_up(out_dim, 128)

    # Clamp tiles to the (aligned) problem size, then pad N so both tiles divide it.
    # For the demo (N=256) this collapses to a single grid step per kernel.
    row_tile = max(8, min(row_tile, _round_up(n, 8)))
    k_tile = max(128, min(k_tile, _round_up(n, 128)))
    n_pad = _round_up(n, math.lcm(row_tile, k_tile))

    # bf16 MXU operands (f32 accumulation inside the kernels), zero-padded.
    x_p = jnp.zeros((n_pad, in_dim), jnp.bfloat16).at[:n, :].set(
        x.astype(jnp.bfloat16))
    adj_p = jnp.zeros((n_pad, n_pad), jnp.bfloat16).at[:n, :n].set(
        adj.astype(jnp.bfloat16))
    w_p = jnp.zeros((in_dim, out_pad), jnp.bfloat16).at[:, :out_dim].set(
        weight.astype(jnp.bfloat16))
    if bias is None:
        b_p = jnp.zeros((1, out_pad), jnp.float32)
    else:
        b_p = jnp.zeros((1, out_pad), jnp.float32).at[0, :out_dim].set(
            bias.astype(jnp.float32))

    # ---- support = X @ W (computed once) -----------------------------------
    support = pl.pallas_call(
        _support_kernel,
        out_shape=jax.ShapeDtypeStruct((n_pad, out_pad), jnp.bfloat16),
        grid_spec=pltpu.PrefetchScalarGridSpec(
            num_scalar_prefetch=0,
            grid=(n_pad // row_tile,),
            in_specs=[
                pl.BlockSpec((row_tile, in_dim), lambda i: (i, 0)),
                pl.BlockSpec((in_dim, out_pad), lambda i: (0, 0)),
            ],
            out_specs=pl.BlockSpec((row_tile, out_pad), lambda i: (i, 0)),
        ),
        compiler_params=pltpu.CompilerParams(
            dimension_semantics=("parallel",)),
    )(x_p, w_p)
    # TODO(synk): k-tile the in_dim reduction as well if in_dim ever gets large.

    # ---- out = adj @ support + bias (k-tiled accumulation) ------------------
    out_padded = pl.pallas_call(
        _aggregate_kernel,
        out_shape=jax.ShapeDtypeStruct((n_pad, out_pad), out_dtype),
        grid_spec=pltpu.PrefetchScalarGridSpec(
            num_scalar_prefetch=0,
            grid=(n_pad // row_tile, n_pad // k_tile),
            in_specs=[
                pl.BlockSpec((row_tile, k_tile), lambda i, k: (i, k)),   # adj tile
                pl.BlockSpec((k_tile, out_pad), lambda i, k: (k, 0)),    # support tile
                pl.BlockSpec((1, out_pad), lambda i, k: (0, 0)),         # bias
            ],
            out_specs=pl.BlockSpec((row_tile, out_pad), lambda i, k: (i, 0)),
            scratch_shapes=[pltpu.VMEM((row_tile, out_pad), jnp.float32)],
        ),
        compiler_params=pltpu.CompilerParams(
            dimension_semantics=("parallel", "arbitrary")),
    )(adj_p, support, b_p)

    return out_padded[:n, :out_dim]


def reference(x, adj, weight, bias):
    return adj @ (x @ weight) + bias[None, :]


if __name__ == "__main__":
    # Small, deterministic problem: N=256 nodes, in_dim=64, out_dim=32.
    key = jax.random.PRNGKey(0)
    k_x, k_adj, k_w, k_b = jax.random.split(key, 4)

    N, in_dim, out_dim = 256, 64, 32

    x = jax.random.normal(k_x, (N, in_dim), dtype=jnp.float32)

    # Dense "sparse" adjacency: random mask, symmetrized, row-normalized.
    mask = (jax.random.uniform(k_adj, (N, N)) < 0.05).astype(jnp.float32)
    adj = mask + mask.T + jnp.eye(N, dtype=jnp.float32)
    adj = adj / jnp.maximum(adj.sum(axis=1, keepdims=True), 1.0)

    # Parameter init mirrors reset_parameters(): uniform(-stdv, stdv), stdv = 1/sqrt(out_dim)
    stdv = 1.0 / math.sqrt(out_dim)
    weight = jax.random.uniform(k_w, (in_dim, out_dim), dtype=jnp.float32,
                                minval=-stdv, maxval=stdv)
    bias = jax.random.uniform(k_b, (out_dim,), dtype=jnp.float32,
                              minval=-stdv, maxval=stdv)

    out = graph_convolution(x, adj, weight, bias)
    out = jax.block_until_ready(out)

    ref = reference(x, adj, weight, bias)
    assert out.shape == (N, out_dim)
    # bf16 MXU operands (f32 accumulation) -> loosened tolerance vs f32 reference.
    assert jnp.allclose(out, ref, atol=2e-2, rtol=2e-2), "mismatch vs reference"

    print("KERNEL_OK")
</pallas_src>

<mosaic_0001>
module attributes {stable_mosaic.version = 11 : i64} {
  func.func @_aggregate_kernel(%arg0: i32, %arg1: i32, %arg2: memref<256x256xbf16, #tpu.memory_space<vmem>>, %arg3: memref<256x128xbf16, #tpu.memory_space<vmem>>, %arg4: memref<1x128xf32, #tpu.memory_space<vmem>>, %arg5: memref<256x128xf32, #tpu.memory_space<vmem>>, %arg6: memref<256x128xf32, #tpu.memory_space<vmem>>) attributes {dimension_semantics = [#tpu.dimension_semantics<parallel>, #tpu.dimension_semantics<arbitrary>], iteration_bounds = array<i64: 1, 1>, scalar_prefetch = 0 : i64, scratch_operands = 1 : i64, tpu.core_type = #tpu.core_type<tc>, window_params = [{transform_indices = @transform_0, window_bounds = array<i64: 256, 256>}, {transform_indices = @transform_1, window_bounds = array<i64: 256, 128>}, {pipeline_mode = #tpu.pipeline_mode<synchronous>, transform_indices = @transform_2, window_bounds = array<i64: 1, 128>}, {transform_indices = @transform_3, window_bounds = array<i64: 256, 128>}]} {
    %c0_i32 = arith.constant 0 : i32
    %0 = arith.cmpi eq, %arg1, %c0_i32 : i32
    %1 = arith.extui %0 : i1 to i32
    %c0_i32_0 = arith.constant 0 : i32
    %2 = arith.cmpi ne, %1, %c0_i32_0 : i32
    scf.if %2 {
      %c0_10 = arith.constant 0 : index
      %c0_11 = arith.constant 0 : index
      %12 = vector.load %arg4[%c0_10, %c0_11] : memref<1x128xf32, #tpu.memory_space<vmem>>, vector<1x128xf32>
      %13 = vector.shape_cast %12 : vector<1x128xf32> to vector<1x128xf32>
      %14 = vector.broadcast %13 : vector<1x128xf32> to vector<256x128xf32>
      %c0_12 = arith.constant 0 : index
      %c0_13 = arith.constant 0 : index
      %15 = vector.load %arg6[%c0_12, %c0_13] : memref<256x128xf32, #tpu.memory_space<vmem>>, vector<256x128xf32>
      tpu.vector_store %arg6[%c0_12, %c0_13], %14 {strides = array<i32>} : memref<256x128xf32, #tpu.memory_space<vmem>>, vector<256x128xf32>,
    } else {
    }
    %c0 = arith.constant 0 : index
    %c0_1 = arith.constant 0 : index
    %3 = vector.load %arg6[%c0, %c0_1] : memref<256x128xf32, #tpu.memory_space<vmem>>, vector<256x128xf32>
    %c0_2 = arith.constant 0 : index
    %c0_3 = arith.constant 0 : index
    %4 = vector.load %arg2[%c0_2, %c0_3] : memref<256x256xbf16, #tpu.memory_space<vmem>>, vector<256x256xbf16>
    %c0_4 = arith.constant 0 : index
    %c0_5 = arith.constant 0 : index
    %5 = vector.load %arg3[%c0_4, %c0_5] : memref<256x128xbf16, #tpu.memory_space<vmem>>, vector<256x128xbf16>
    %cst = arith.constant dense<0.000000e+00> : vector<256x128xf32>
    %6 = tpu.matmul %4, %5, %cst {dimension_numbers = #tpu.dot_dimension_numbers<[1], [0], [0], [1], [0, 0, 1, 1], [], []>} : vector<256x256xbf16>, vector<256x128xbf16>, vector<256x128xf32> -> vector<256x128xf32>
    %7 = arith.addf %3, %6 : vector<256x128xf32>
    %c0_6 = arith.constant 0 : index
    %c0_7 = arith.constant 0 : index
    %8 = vector.load %arg6[%c0_6, %c0_7] : memref<256x128xf32, #tpu.memory_space<vmem>>, vector<256x128xf32>
    tpu.vector_store %arg6[%c0_6, %c0_7], %7 {strides = array<i32>} : memref<256x128xf32, #tpu.memory_space<vmem>>, vector<256x128xf32>,
    %c0_i32_8 = arith.constant 0 : i32
    %9 = arith.cmpi eq, %arg1, %c0_i32_8 : i32
    %10 = arith.extui %9 : i1 to i32
    %c0_i32_9 = arith.constant 0 : i32
    %11 = arith.cmpi ne, %10, %c0_i32_9 : i32
    scf.if %11 {
      %c0_10 = arith.constant 0 : index
      %c0_11 = arith.constant 0 : index
      %12 = vector.load %arg6[%c0_10, %c0_11] : memref<256x128xf32, #tpu.memory_space<vmem>>, vector<256x128xf32>
      %c0_12 = arith.constant 0 : index
      %c0_13 = arith.constant 0 : index
      %13 = vector.load %arg5[%c0_12, %c0_13] : memref<256x128xf32, #tpu.memory_space<vmem>>, vector<256x128xf32>
      tpu.vector_store %arg5[%c0_12, %c0_13], %12 {strides = array<i32>} : memref<256x128xf32, #tpu.memory_space<vmem>>, vector<256x128xf32>,
    } else {
    }
    return
  }
  func.func @transform_0(%arg0: i32, %arg1: i32) -> (i32, i32) {
    %c0_i32 = arith.constant 0 : i32
    return %arg0, %arg1 : i32, i32
  }
  func.func @transform_1(%arg0: i32, %arg1: i32) -> (i32, i32) {
    %c0_i32 = arith.constant 0 : i32
    %c0_i32_0 = arith.constant 0 : i32
    return %arg1, %c0_i32 : i32, i32
  }
  func.func @transform_2(%arg0: i32, %arg1: i32) -> (i32, i32) {
    %c0_i32 = arith.constant 0 : i32
    %c0_i32_0 = arith.constant 0 : i32
    %c0_i32_1 = arith.constant 0 : i32
    return %c0_i32, %c0_i32_0 : i32, i32
  }
  func.func @transform_3(%arg0: i32, %arg1: i32) -> (i32, i32) {
    %c0_i32 = arith.constant 0 : i32
    %c0_i32_0 = arith.constant 0 : i32
    return %arg0, %c0_i32 : i32, i32
  }
}

module attributes {stable_mosaic.version = 11 : i64} {
  func.func @_support_kernel(%arg0: i32, %arg1: memref<256x64xbf16, #tpu.memory_space<vmem>>, %arg2: memref<64x128xbf16, #tpu.memory_space<vmem>>, %arg3: memref<256x128xbf16, #tpu.memory_space<vmem>>) attributes {dimension_semantics = [#tpu.dimension_semantics<parallel>], iteration_bounds = array<i64: 1>, scalar_prefetch = 0 : i64, scratch_operands = 0 : i64, tpu.core_type = #tpu.core_type<tc>, window_params = [{transform_indices = @transform_0, window_bounds = array<i64: 256, 64>}, {pipeline_mode = #tpu.pipeline_mode<synchronous>, transform_indices = @transform_1, window_bounds = array<i64: 64, 128>}, {transform_indices = @transform_2, window_bounds = array<i64: 256, 128>}]} {
    %c0 = arith.constant 0 : index
    %c0_0 = arith.constant 0 : index
    %0 = vector.load %arg1[%c0, %c0_0] : memref<256x64xbf16, #tpu.memory_space<vmem>>, vector<256x64xbf16>
    %c0_1 = arith.constant 0 : index
    %c0_2 = arith.constant 0 : index
    %1 = vector.load %arg2[%c0_1, %c0_2] : memref<64x128xbf16, #tpu.memory_space<vmem>>, vector<64x128xbf16>
    %cst = arith.constant dense<0.000000e+00> : vector<256x128xf32>
    %2 = tpu.matmul %0, %1, %cst {dimension_numbers = #tpu.dot_dimension_numbers<[1], [0], [0], [1], [0, 0, 1, 1], [], []>} : vector<256x64xbf16>, vector<64x128xbf16>, vector<256x128xf32> -> vector<256x128xf32>
    %3 = arith.truncf %2 : vector<256x128xf32> to vector<256x128xbf16>
    %c0_3 = arith.constant 0 : index
    %c0_4 = arith.constant 0 : index
    %4 = vector.load %arg3[%c0_3, %c0_4] : memref<256x128xbf16, #tpu.memory_space<vmem>>, vector<256x128xbf16>
    tpu.vector_store %arg3[%c0_3, %c0_4], %3 {strides = array<i32>} : memref<256x128xbf16, #tpu.memory_space<vmem>>, vector<256x128xbf16>,
    return
  }
  func.func @transform_0(%arg0: i32) -> (i32, i32) {
    %c0_i32 = arith.constant 0 : i32
    %c0_i32_0 = arith.constant 0 : i32
    return %arg0, %c0_i32 : i32, i32
  }
  func.func @transform_1(%arg0: i32) -> (i32, i32) {
    %c0_i32 = arith.constant 0 : i32
    %c0_i32_0 = arith.constant 0 : i32
    %c0_i32_1 = arith.constant 0 : i32
    return %c0_i32, %c0_i32_0 : i32, i32
  }
  func.func @transform_2(%arg0: i32) -> (i32, i32) {
    %c0_i32 = arith.constant 0 : i32
    %c0_i32_0 = arith.constant 0 : i32
    return %arg0, %c0_i32 : i32, i32
  }
}

</mosaic_0001>

<llo_original>
// kernel: graph_convolution.3
$region0: #{graph_convolution.3}
  #allocation0 [shape = 'u32[]', space=smem, size = 0x4, offset = 0x4, fixed_abs, tag = 'smem constant byte address 0x4 - core index']
  #allocation1 [shape = 'u32[72,128]{1,0:T(1,128)}', space=vmem, size = 0x9000, scoped, tag = 'internal scratch']
  #allocation2 [shape = 'f32[256,128]{1,0:T(8,128)}', space=vmem, size = 0x20000, scoped, tag = 'scratch operand']
  %s0 = inlined_call_operand.vmem [shape: bf16[256,256], index: 0, kind: input, shape index: {}]
  %s1 = inlined_call_operand.vmem [shape: bf16[256,128], index: 1, kind: input, shape index: {}]
  %s2 = inlined_call_operand.vmem [shape: f32[1,128], index: 2, kind: input, shape index: {}]
  %s3 = inlined_call_operand.vmem [shape: f32[256,128], index: 3, kind: output, shape index: {}]
  %s4 = sld [smem:[#allocation0]]
  $region30: #{graph_convolution.3} parent=0
    _
  %s6 = ssub.s32 1, %s4
  %s7 = scalar_select 0, %s6, %s4
  // Predicated region
  $region2: #{graph_convolution.3} parent=0 // pred_check
    _
  $region3: #{graph_convolution.3} parent=0 // pred_check_branch
    %9 = sbr.rel (0) target = $region5
  $region4: #{graph_convolution.3} parent=0 // pred_region
    _
  $region5: #{graph_convolution.3} parent=0 // pred_fallthru
    _
  // Predicated region
  $region6: #{graph_convolution.3} parent=0 // pred_check
    _
  $region7: #{graph_convolution.3} parent=0 // pred_check_branch
    %11 = sbr.rel (0) target = $region9
  $region8: #{graph_convolution.3} parent=0 // pred_region
    _
  $region9: #{graph_convolution.3} parent=0 // pred_fallthru
    _
  // Predicated region
  $region10: #{graph_convolution.3} parent=0 // pred_check
    _
  $region11: #{graph_convolution.3} parent=0 // pred_check_branch
    %13 = sbr.rel (0) target = $region13
  $region12: #{graph_convolution.3} parent=0 // pred_region
    _
  $region13: #{graph_convolution.3} parent=0 // pred_fallthru
    _
  %p14 = scmp.eq.s32.totalorder 0, 0
  // Predicated region
  $region14: #{graph_convolution.3} parent=0 // pred_check
    %p15 = pneg %p14
  $region15: #{graph_convolution.3} parent=0 // pred_check_branch
    %17 = sbr.rel (%p15) target = $region17
  $region16: #{graph_convolution.3} parent=0 // pred_region
    %v18 = vld [vmem:[%s2] sm:$0x1]
    %v20 = vperm.slane %v18, 0
    %22 = vst [vmem:[#allocation2] sm:$0xff] %v20
    %23 = vst [vmem:[#allocation2 + $0x8] sm:$0xff] %v20
    %24 = vst [vmem:[#allocation2 + $0x10] sm:$0xff] %v20
    %25 = vst [vmem:[#allocation2 + $0x18] sm:$0xff] %v20
    %26 = vst [vmem:[#allocation2 + $0x20] sm:$0xff] %v20
    %27 = vst [vmem:[#allocation2 + $0x28] sm:$0xff] %v20
    %28 = vst [vmem:[#allocation2 + $0x30] sm:$0xff] %v20
    %29 = vst [vmem:[#allocation2 + $0x38] sm:$0xff] %v20
    %30 = vst [vmem:[#allocation2 + $0x40] sm:$0xff] %v20
    %31 = vst [vmem:[#allocation2 + $0x48] sm:$0xff] %v20
    %32 = vst [vmem:[#allocation2 + $0x50] sm:$0xff] %v20
    %33 = vst [vmem:[#allocation2 + $0x58] sm:$0xff] %v20
    %34 = vst [vmem:[#allocation2 + $0x60] sm:$0xff] %v20
    %35 = vst [vmem:[#allocation2 + $0x68] sm:$0xff] %v20
    %36 = vst [vmem:[#allocation2 + $0x70] sm:$0xff] %v20
    %37 = vst [vmem:[#allocation2 + $0x78] sm:$0xff] %v20
    %38 = vst [vmem:[#allocation2 + $0x80] sm:$0xff] %v20
    %39 = vst [vmem:[#allocation2 + $0x88] sm:$0xff] %v20
    %40 = vst [vmem:[#allocation2 + $0x90] sm:$0xff] %v20
    %41 = vst [vmem:[#allocation2 + $0x98] sm:$0xff] %v20
    %42 = vst [vmem:[#allocation2 + $0xa0] sm:$0xff] %v20
    %43 = vst [vmem:[#allocation2 + $0xa8] sm:$0xff] %v20
    %44 = vst [vmem:[#allocation2 + $0xb0] sm:$0xff] %v20
    %45 = vst [vmem:[#allocation2 + $0xb8] sm:$0xff] %v20
    %46 = vst [vmem:[#allocation2 + $0xc0] sm:$0xff] %v20
    %47 = vst [vmem:[#allocation2 + $0xc8] sm:$0xff] %v20
    %48 = vst [vmem:[#allocation2 + $0xd0] sm:$0xff] %v20
    %49 = vst [vmem:[#allocation2 + $0xd8] sm:$0xff] %v20
    %50 = vst [vmem:[#allocation2 + $0xe0] sm:$0xff] %v20
    %51 = vst [vmem:[#allocation2 + $0xe8] sm:$0xff] %v20
    %52 = vst [vmem:[#allocation2 + $0xf0] sm:$0xff] %v20
    %53 = vst [vmem:[#allocation2 + $0xf8] sm:$0xff] %v20
  $region17: #{graph_convolution.3} parent=0 // pred_fallthru
    _
  %v54 = vld [vmem:[#allocation2] sm:$0xff]
  %v55 = vld [vmem:[#allocation2 + $0x8] sm:$0xff]
  %v56 = vld [vmem:[#allocation2 + $0x10] sm:$0xff]
  %v57 = vld [vmem:[#allocation2 + $0x18] sm:$0xff]
  %v58 = vld [vmem:[#allocation2 + $0x20] sm:$0xff]
  %v59 = vld [vmem:[#allocation2 + $0x28] sm:$0xff]
  %v60 = vld [vmem:[#allocation2 + $0x30] sm:$0xff]
  %v61 = vld [vmem:[#allocation2 + $0x38] sm:$0xff]
  %v62 = vld [vmem:[#allocation2 + $0x40] sm:$0xff]
  %v63 = vld [vmem:[#allocation2 + $0x48] sm:$0xff]
  %v64 = vld [vmem:[#allocation2 + $0x50] sm:$0xff]
  %v65 = vld [vmem:[#allocation2 + $0x58] sm:$0xff]
  %v66 = vld [vmem:[#allocation2 + $0x60] sm:$0xff]
  %v67 = vld [vmem:[#allocation2 + $0x68] sm:$0xff]
  %v68 = vld [vmem:[#allocation2 + $0x70] sm:$0xff]
  %v69 = vld [vmem:[#allocation2 + $0x78] sm:$0xff]
  %v70 = vld [vmem:[#allocation2 + $0x80] sm:$0xff]
  %v71 = vld [vmem:[#allocation2 + $0x88] sm:$0xff]
  %v72 = vld [vmem:[#allocation2 + $0x90] sm:$0xff]
  %v73 = vld [vmem:[#allocation2 + $0x98] sm:$0xff]
  %v74 = vld [vmem:[#allocation2 + $0xa0] sm:$0xff]
  %v75 = vld [vmem:[#allocation2 + $0xa8] sm:$0xff]
  %v76 = vld [vmem:[#allocation2 + $0xb0] sm:$0xff]
  %v77 = vld [vmem:[#allocation2 + $0xb8] sm:$0xff]
  %v78 = vld [vmem:[#allocation2 + $0xc0] sm:$0xff]
  %v79 = vld [vmem:[#allocation2 + $0xc8] sm:$0xff]
  %v80 = vld [vmem:[#allocation2 + $0xd0] sm:$0xff]
  %v81 = vld [vmem:[#allocation2 + $0xd8] sm:$0xff]
  %v82 = vld [vmem:[#allocation2 + $0xe0] sm:$0xff]
  %v83 = vld [vmem:[#allocation2 + $0xe8] sm:$0xff]
  %v84 = vld [vmem:[#allocation2 + $0xf0] sm:$0xff]
  %v85 = vld [vmem:[#allocation2 + $0xf8] sm:$0xff]
  %v86 = vld [vmem:[%s0] sm:$0xff]
  %v87 = vld [vmem:[%s0 + $0x8] sm:$0xff]
  %v88 = vld [vmem:[%s0 + $0x10] sm:$0xff]
  %v89 = vld [vmem:[%s0 + $0x18] sm:$0xff]
  %v90 = vld [vmem:[%s0 + $0x20] sm:$0xff]
  %v91 = vld [vmem:[%s0 + $0x28] sm:$0xff]
  %v92 = vld [vmem:[%s0 + $0x30] sm:$0xff]
  %v93 = vld [vmem:[%s0 + $0x38] sm:$0xff]
  %v94 = vld [vmem:[%s0 + $0x40] sm:$0xff]
  %v95 = vld [vmem:[%s0 + $0x48] sm:$0xff]
  %v96 = vld [vmem:[%s0 + $0x50] sm:$0xff]
  %v97 = vld [vmem:[%s0 + $0x58] sm:$0xff]
  %v98 = vld [vmem:[%s0 + $0x60] sm:$0xff]
  %v99 = vld [vmem:[%s0 + $0x68] sm:$0xff]
  %v100 = vld [vmem:[%s0 + $0x70] sm:$0xff]
  %v101 = vld [vmem:[%s0 + $0x78] sm:$0xff]
  %v102 = vld [vmem:[%s0 + $0x80] sm:$0xff]
  %v103 = vld [vmem:[%s0 + $0x88] sm:$0xff]
  %v104 = vld [vmem:[%s0 + $0x90] sm:$0xff]
  %v105 = vld [vmem:[%s0 + $0x98] sm:$0xff]
  %v106 = vld [vmem:[%s0 + $0xa0] sm:$0xff]
  %v107 = vld [vmem:[%s0 + $0xa8] sm:$0xff]
  %v108 = vld [vmem:[%s0 + $0xb0] sm:$0xff]
  %v109 = vld [vmem:[%s0 + $0xb8] sm:$0xff]
  %v110 = vld [vmem:[%s0 + $0xc0] sm:$0xff]
  %v111 = vld [vmem:[%s0 + $0xc8] sm:$0xff]
  %v112 = vld [vmem:[%s0 + $0xd0] sm:$0xff]
  %v113 = vld [vmem:[%s0 + $0xd8] sm:$0xff]
  %v114 = vld [vmem:[%s0 + $0xe0] sm:$0xff]
  %v115 = vld [vmem:[%s0 + $0xe8] sm:$0xff]
  %v116 = vld [vmem:[%s0 + $0xf0] sm:$0xff]
  %v117 = vld [vmem:[%s0 + $0xf8] sm:$0xff]
  %v118 = vld [vmem:[%s1] sm:$0xf]
  %v119 = vld [vmem:[%s1 + $0x4] sm:$0xf]
  %v120 = vld [vmem:[%s1 + $0x8] sm:$0xf]
  %v121 = vld [vmem:[%s1 + $0xc] sm:$0xf]
  %v122 = vld [vmem:[%s1 + $0x10] sm:$0xf]
  %v123 = vld [vmem:[%s1 + $0x14] sm:$0xf]
  %v124 = vld [vmem:[%s1 + $0x18] sm:$0xf]
  %v125 = vld [vmem:[%s1 + $0x1c] sm:$0xf]
  %v126 = vld [vmem:[%s1 + $0x20] sm:$0xf]
  %v127 = vld [vmem:[%s1 + $0x24] sm:$0xf]
  %v128 = vld [vmem:[%s1 + $0x28] sm:$0xf]
  %v129 = vld [vmem:[%s1 + $0x2c] sm:$0xf]
  %v130 = vld [vmem:[%s1 + $0x30] sm:$0xf]
  %v131 = vld [vmem:[%s1 + $0x34] sm:$0xf]
  %v132 = vld [vmem:[%s1 + $0x38] sm:$0xf]
  %v133 = vld [vmem:[%s1 + $0x3c] sm:$0xf]
  %v134 = vld [vmem:[%s1 + $0x40] sm:$0xf]
  %v135 = vld [vmem:[%s1 + $0x44] sm:$0xf]
  %v136 = vld [vmem:[%s1 + $0x48] sm:$0xf]
  %v137 = vld [vmem:[%s1 + $0x4c] sm:$0xf]
  %v138 = vld [vmem:[%s1 + $0x50] sm:$0xf]
  %v139 = vld [vmem:[%s1 + $0x54] sm:$0xf]
  %v140 = vld [vmem:[%s1 + $0x58] sm:$0xf]
  %v141 = vld [vmem:[%s1 + $0x5c] sm:$0xf]
  %v142 = vld [vmem:[%s1 + $0x60] sm:$0xf]
  %v143 = vld [vmem:[%s1 + $0x64] sm:$0xf]
  %v144 = vld [vmem:[%s1 + $0x68] sm:$0xf]
  %v145 = vld [vmem:[%s1 + $0x6c] sm:$0xf]
  %v146 = vld [vmem:[%s1 + $0x70] sm:$0xf]
  %v147 = vld [vmem:[%s1 + $0x74] sm:$0xf]
  %v148 = vld [vmem:[%s1 + $0x78] sm:$0xf]
  %v149 = vld [vmem:[%s1 + $0x7c] sm:$0xf]
  %v182 = vunpack.c.l.b16 %v86
  %v183 = vunpack.c.h.b16 %v86
  %v184 = vunpack.c.l.b16 %v87
  %v185 = vunpack.c.h.b16 %v87
  %v186 = vunpack.c.l.b16 %v88
  %v187 = vunpack.c.h.b16 %v88
  %v188 = vunpack.c.l.b16 %v89
  %v189 = vunpack.c.h.b16 %v89
  %v190 = vunpack.c.l.b16 %v90
  %v191 = vunpack.c.h.b16 %v90
  %v192 = vunpack.c.l.b16 %v91
  %v193 = vunpack.c.h.b16 %v91
  %v194 = vunpack.c.l.b16 %v92
  %v195 = vunpack.c.h.b16 %v92
  %v196 = vunpack.c.l.b16 %v93
  %v197 = vunpack.c.h.b16 %v93
  %v198 = vunpack.c.l.b16 %v94
  %v199 = vunpack.c.h.b16 %v94
  %v200 = vunpack.c.l.b16 %v95
  %v201 = vunpack.c.h.b16 %v95
  %v202 = vunpack.c.l.b16 %v96
  %v203 = vunpack.c.h.b16 %v96
  %v204 = vunpack.c.l.b16 %v97
  %v205 = vunpack.c.h.b16 %v97
  %v206 = vunpack.c.l.b16 %v98
  %v207 = vunpack.c.h.b16 %v98
  %v208 = vunpack.c.l.b16 %v99
  %v209 = vunpack.c.h.b16 %v99
  %v210 = vunpack.c.l.b16 %v100
  %v211 = vunpack.c.h.b16 %v100
  %v212 = vunpack.c.l.b16 %v101
  %v213 = vunpack.c.h.b16 %v101
  %v214 = vunpack.c.l.b16 %v102
  %v215 = vunpack.c.h.b16 %v102
  %v216 = vunpack.c.l.b16 %v103
  %v217 = vunpack.c.h.b16 %v103
  %v218 = vunpack.c.l.b16 %v104
  %v219 = vunpack.c.h.b16 %v104
  %v220 = vunpack.c.l.b16 %v105
  %v221 = vunpack.c.h.b16 %v105
  %v222 = vunpack.c.l.b16 %v106
  %v223 = vunpack.c.h.b16 %v106
  %v224 = vunpack.c.l.b16 %v107
  %v225 = vunpack.c.h.b16 %v107
  %v226 = vunpack.c.l.b16 %v108
  %v227 = vunpack.c.h.b16 %v108
  %v228 = vunpack.c.l.b16 %v109
  %v229 = vunpack.c.h.b16 %v109
  %v230 = vunpack.c.l.b16 %v110
  %v231 = vunpack.c.h.b16 %v110
  %v232 = vunpack.c.l.b16 %v111
  %v233 = vunpack.c.h.b16 %v111
  %v234 = vunpack.c.l.b16 %v112
  %v235 = vunpack.c.h.b16 %v112
  %v236 = vunpack.c.l.b16 %v113
  %v237 = vunpack.c.h.b16 %v113
  %v238 = vunpack.c.l.b16 %v114
  %v239 = vunpack.c.h.b16 %v114
  %v240 = vunpack.c.l.b16 %v115
  %v241 = vunpack.c.h.b16 %v115
  %v242 = vunpack.c.l.b16 %v116
  %v243 = vunpack.c.h.b16 %v116
  %v244 = vunpack.c.l.b16 %v117
  %v245 = vunpack.c.h.b16 %v117
  %v246 = vpack.c.b16 %v184, %v182
  %v247 = vpack.c.b16 %v185, %v183
  %v248 = vpack.c.b16 %v188, %v186
  %v249 = vpack.c.b16 %v189, %v187
  %v250 = vpack.c.b16 %v192, %v190
  %v251 = vpack.c.b16 %v193, %v191
  %v252 = vpack.c.b16 %v196, %v194
  %v253 = vpack.c.b16 %v197, %v195
  %v254 = vpack.c.b16 %v200, %v198
  %v255 = vpack.c.b16 %v201, %v199
  %v256 = vpack.c.b16 %v204, %v202
  %v257 = vpack.c.b16 %v205, %v203
  %v258 = vpack.c.b16 %v208, %v206
  %v259 = vpack.c.b16 %v209, %v207
  %v260 = vpack.c.b16 %v212, %v210
  %v261 = vpack.c.b16 %v213, %v211
  %v262 = vpack.c.b16 %v216, %v214
  %v263 = vpack.c.b16 %v217, %v215
  %v264 = vpack.c.b16 %v220, %v218
  %v265 = vpack.c.b16 %v221, %v219
  %v266 = vpack.c.b16 %v224, %v222
  %v267 = vpack.c.b16 %v225, %v223
  %v268 = vpack.c.b16 %v228, %v226
  %v269 = vpack.c.b16 %v229, %v227
  %v270 = vpack.c.b16 %v232, %v230
  %v271 = vpack.c.b16 %v233, %v231
  %v272 = vpack.c.b16 %v236, %v234
  %v273 = vpack.c.b16 %v237, %v235
  %v274 = vpack.c.b16 %v240, %v238
  %v275 = vpack.c.b16 %v241, %v239
  %v276 = vpack.c.b16 %v244, %v242
  %v277 = vpack.c.b16 %v245, %v243
  %v342 = vunpack.c.l.b16 %v118
  %v343 = vunpack.c.l.b16 %v119
  %v344 = vunpack.c.l.b16 %v120
  %v345 = vunpack.c.l.b16 %v121
  %v346 = vunpack.c.l.b16 %v122
  %v347 = vunpack.c.l.b16 %v123
  %v348 = vunpack.c.l.b16 %v124
  %v349 = vunpack.c.l.b16 %v125
  %v350 = vunpack.c.l.b16 %v126
  %v351 = vunpack.c.l.b16 %v127
  %v352 = vunpack.c.l.b16 %v128
  %v353 = vunpack.c.l.b16 %v129
  %v354 = vunpack.c.l.b16 %v130
  %v355 = vunpack.c.l.b16 %v131
  %v356 = vunpack.c.l.b16 %v132
  %v357 = vunpack.c.l.b16 %v133
  %v358 = vunpack.c.l.b16 %v134
  %v359 = vunpack.c.l.b16 %v135
  %v360 = vunpack.c.l.b16 %v136
  %v361 = vunpack.c.l.b16 %v137
  %v362 = vunpack.c.l.b16 %v138
  %v363 = vunpack.c.l.b16 %v139
  %v364 = vunpack.c.l.b16 %v140
  %v365 = vunpack.c.l.b16 %v141
  %v366 = vunpack.c.l.b16 %v142
  %v367 = vunpack.c.l.b16 %v143
  %v368 = vunpack.c.l.b16 %v144
  %v369 = vunpack.c.l.b16 %v145
  %v370 = vunpack.c.l.b16 %v146
  %v371 = vunpack.c.l.b16 %v147
  %v372 = vunpack.c.l.b16 %v148
  %v373 = vunpack.c.l.b16 %v149
  %v374 = vpack.c.b16 %v343, %v342
  %v375 = vpack.c.b16 %v345, %v344
  %v376 = vpack.c.b16 %v347, %v346
  %v377 = vpack.c.b16 %v349, %v348
  %v378 = vpack.c.b16 %v351, %v350
  %v379 = vpack.c.b16 %v353, %v352
  %v380 = vpack.c.b16 %v355, %v354
  %v381 = vpack.c.b16 %v357, %v356
  %v382 = vpack.c.b16 %v359, %v358
  %v383 = vpack.c.b16 %v361, %v360
  %v384 = vpack.c.b16 %v363, %v362
  %v385 = vpack.c.b16 %v365, %v364
  %v386 = vpack.c.b16 %v367, %v366
  %v387 = vpack.c.b16 %v369, %v368
  %v388 = vpack.c.b16 %v371, %v370
  %v389 = vpack.c.b16 %v373, %v372
  %406 = vmatpush.bf16.msra.mxu0 %v381
  %407 = vmatpush.bf16.msra.mxu0 %v380
  %408 = vmatpush.bf16.msra.mxu0 %v379
  %409 = vmatpush.bf16.msra.mxu0 %v378
  %410 = vmatpush.bf16.msra.mxu0 %v377
  %411 = vmatpush.bf16.msra.mxu0 %v376
  %412 = vmatpush.bf16.msra.mxu0 %v375
  %413 = vmatpush.bf16.msra.mxu0 %v374
  %414 = vmatmul.bf16.gmra.mxu0 %v246
  %v415 = vpop.f32.mrf.mxu0
  %v416 = vadd.f32 0.0, %v415
  %v417 = vpop.f32.mrf.mxu0
  %v418 = vadd.f32 0.0, %v417
  %419 = vmatmul.bf16.gmra.mxu0 %v248
  %v420 = vpop.f32.mrf.mxu0
  %v421 = vadd.f32 0.0, %v420
  %v422 = vpop.f32.mrf.mxu0
  %v423 = vadd.f32 0.0, %v422
  %424 = vmatmul.bf16.gmra.mxu0 %v250
  %v425 = vpop.f32.mrf.mxu0
  %v426 = vadd.f32 0.0, %v425
  %v427 = vpop.f32.mrf.mxu0
  %v428 = vadd.f32 0.0, %v427
  %429 = vmatmul.bf16.gmra.mxu0 %v252
  %v430 = vpop.f32.mrf.mxu0
  %v431 = vadd.f32 0.0, %v430
  %v432 = vpop.f32.mrf.mxu0
  %v433 = vadd.f32 0.0, %v432
  %434 = vmatmul.bf16.gmra.mxu0 %v254
  %v435 = vpop.f32.mrf.mxu0
  %v436 = vadd.f32 0.0, %v435
  %v437 = vpop.f32.mrf.mxu0
  %v438 = vadd.f32 0.0, %v437
  %439 = vmatmul.bf16.gmra.mxu0 %v256
  %v440 = vpop.f32.mrf.mxu0
  %v441 = vadd.f32 0.0, %v440
  %v442 = vpop.f32.mrf.mxu0
  %v443 = vadd.f32 0.0, %v442
  %444 = vmatmul.bf16.gmra.mxu0 %v258
  %v445 = vpop.f32.mrf.mxu0
  %v446 = vadd.f32 0.0, %v445
  %v447 = vpop.f32.mrf.mxu0
  %v448 = vadd.f32 0.0, %v447
  %449 = vmatmul.bf16.gmra.mxu0 %v260
  %v450 = vpop.f32.mrf.mxu0
  %v451 = vadd.f32 0.0, %v450
  %v452 = vpop.f32.mrf.mxu0
  %v453 = vadd.f32 0.0, %v452
  %454 = vmatmul.bf16.gmra.mxu0 %v262
  %v455 = vpop.f32.mrf.mxu0
  %v456 = vadd.f32 0.0, %v455
  %v457 = vpop.f32.mrf.mxu0
  %v458 = vadd.f32 0.0, %v457
  %459 = vmatmul.bf16.gmra.mxu0 %v264
  %v460 = vpop.f32.mrf.mxu0
  %v461 = vadd.f32 0.0, %v460
  %v462 = vpop.f32.mrf.mxu0
  %v463 = vadd.f32 0.0, %v462
  %464 = vmatmul.bf16.gmra.mxu0 %v266
  %v465 = vpop.f32.mrf.mxu0
  %v466 = vadd.f32 0.0, %v465
  %v467 = vpop.f32.mrf.mxu0
  %v468 = vadd.f32 0.0, %v467
  %469 = vmatmul.bf16.gmra.mxu0 %v268
  %v470 = vpop.f32.mrf.mxu0
  %v471 = vadd.f32 0.0, %v470
  %v472 = vpop.f32.mrf.mxu0
  %v473 = vadd.f32 0.0, %v472
  %474 = vmatmul.bf16.gmra.mxu0 %v270
  %v475 = vpop.f32.mrf.mxu0
  %v476 = vadd.f32 0.0, %v475
  %v477 = vpop.f32.mrf.mxu0
  %v478 = vadd.f32 0.0, %v477
  %479 = vmatmul.bf16.gmra.mxu0 %v272
  %v480 = vpop.f32.mrf.mxu0
  %v481 = vadd.f32 0.0, %v480
  %v482 = vpop.f32.mrf.mxu0
  %v483 = vadd.f32 0.0, %v482
  %484 = vmatmul.bf16.gmra.mxu0 %v274
  %v485 = vpop.f32.mrf.mxu0
  %v486 = vadd.f32 0.0, %v485
  %v487 = vpop.f32.mrf.mxu0
  %v488 = vadd.f32 0.0, %v487
  %489 = vmatmul.bf16.gmra.mxu0 %v276
  %v490 = vpop.f32.mrf.mxu0
  %v491 = vadd.f32 0.0, %v490
  %v492 = vpop.f32.mrf.mxu0
  %v493 = vadd.f32 0.0, %v492
  %494 = vdwg.mxu0
  %495 = vmatpush.bf16.msra.mxu0 %v389
  %496 = vmatpush.bf16.msra.mxu0 %v388
  %497 = vmatpush.bf16.msra.mxu0 %v387
  %498 = vmatpush.bf16.msra.mxu0 %v386
  %499 = vmatpush.bf16.msra.mxu0 %v385
  %500 = vmatpush.bf16.msra.mxu0 %v384
  %501 = vmatpush.bf16.msra.mxu0 %v383
  %502 = vmatpush.bf16.msra.mxu0 %v382
  %503 = vmatmul.bf16.gmra.mxu0 %v247
  %v504 = vpop.f32.mrf.mxu0
  %v505 = vadd.f32 %v416, %v504
  %v506 = vpop.f32.mrf.mxu0
  %v507 = vadd.f32 %v418, %v506
  %508 = vmatmul.bf16.gmra.mxu0 %v249
  %v509 = vpop.f32.mrf.mxu0
  %v510 = vadd.f32 %v421, %v509
  %v511 = vpop.f32.mrf.mxu0
  %v512 = vadd.f32 %v423, %v511
  %513 = vmatmul.bf16.gmra.mxu0 %v251
  %v514 = vpop.f32.mrf.mxu0
  %v515 = vadd.f32 %v426, %v514
  %v516 = vpop.f32.mrf.mxu0
  %v517 = vadd.f32 %v428, %v516
  %518 = vmatmul.bf16.gmra.mxu0 %v253
  %v519 = vpop.f32.mrf.mxu0
  %v520 = vadd.f32 %v431, %v519
  %v521 = vpop.f32.mrf.mxu0
  %v522 = vadd.f32 %v433, %v521
  %523 = vmatmul.bf16.gmra.mxu0 %v255
  %v524 = vpop.f32.mrf.mxu0
  %v525 = vadd.f32 %v436, %v524
  %v526 = vpop.f32.mrf.mxu0
  %v527 = vadd.f32 %v438, %v526
  %528 = vmatmul.bf16.gmra.mxu0 %v257
  %v529 = vpop.f32.mrf.mxu0
  %v530 = vadd.f32 %v441, %v529
  %v531 = vpop.f32.mrf.mxu0
  %v532 = vadd.f32 %v443, %v531
  %533 = vmatmul.bf16.gmra.mxu0 %v259
  %v534 = vpop.f32.mrf.mxu0
  %v535 = vadd.f32 %v446, %v534
  %v536 = vpop.f32.mrf.mxu0
  %v537 = vadd.f32 %v448, %v536
  %538 = vmatmul.bf16.gmra.mxu0 %v261
  %v539 = vpop.f32.mrf.mxu0
  %v540 = vadd.f32 %v451, %v539
  %v541 = vpop.f32.mrf.mxu0
  %v542 = vadd.f32 %v453, %v541
  %543 = vmatmul.bf16.gmra.mxu0 %v263
  %v544 = vpop.f32.mrf.mxu0
  %v545 = vadd.f32 %v456, %v544
  %v546 = vpop.f32.mrf.mxu0
  %v547 = vadd.f32 %v458, %v546
  %548 = vmatmul.bf16.gmra.mxu0 %v265
  %v549 = vpop.f32.mrf.mxu0
  %v550 = vadd.f32 %v461, %v549
  %v551 = vpop.f32.mrf.mxu0
  %v552 = vadd.f32 %v463, %v551
  %553 = vmatmul.bf16.gmra.mxu0 %v267
  %v554 = vpop.f32.mrf.mxu0
  %v555 = vadd.f32 %v466, %v554
  %v556 = vpop.f32.mrf.mxu0
  %v557 = vadd.f32 %v468, %v556
  %558 = vmatmul.bf16.gmra.mxu0 %v269
  %v559 = vpop.f32.mrf.mxu0
  %v560 = vadd.f32 %v471, %v559
  %v561 = vpop.f32.mrf.mxu0
  %v562 = vadd.f32 %v473, %v561
  %563 = vmatmul.bf16.gmra.mxu0 %v271
  %v564 = vpop.f32.mrf.mxu0
  %v565 = vadd.f32 %v476, %v564
  %v566 = vpop.f32.mrf.mxu0
  %v567 = vadd.f32 %v478, %v566
  %568 = vmatmul.bf16.gmra.mxu0 %v273
  %v569 = vpop.f32.mrf.mxu0
  %v570 = vadd.f32 %v481, %v569
  %v571 = vpop.f32.mrf.mxu0
  %v572 = vadd.f32 %v483, %v571
  %573 = vmatmul.bf16.gmra.mxu0 %v275
  %v574 = vpop.f32.mrf.mxu0
  %v575 = vadd.f32 %v486, %v574
  %v576 = vpop.f32.mrf.mxu0
  %v577 = vadd.f32 %v488, %v576
  %578 = vmatmul.bf16.gmra.mxu0 %v277
  %v579 = vpop.f32.mrf.mxu0
  %v580 = vadd.f32 %v491, %v579
  %v581 = vpop.f32.mrf.mxu0
  %v582 = vadd.f32 %v493, %v581
  %583 = vdwg.mxu0
  %v584 = vadd.f32 %v54, %v505
  %v585 = vadd.f32 %v55, %v507
  %v586 = vadd.f32 %v56, %v510
  %v587 = vadd.f32 %v57, %v512
  %v588 = vadd.f32 %v58, %v515
  %v589 = vadd.f32 %v59, %v517
  %v590 = vadd.f32 %v60, %v520
  %v591 = vadd.f32 %v61, %v522
  %v592 = vadd.f32 %v62, %v525
  %v593 = vadd.f32 %v63, %v527
  %v594 = vadd.f32 %v64, %v530
  %v595 = vadd.f32 %v65, %v532
  %v596 = vadd.f32 %v66, %v535
  %v597 = vadd.f32 %v67, %v537
  %v598 = vadd.f32 %v68, %v540
  %v599 = vadd.f32 %v69, %v542
  %v600 = vadd.f32 %v70, %v545
  %v601 = vadd.f32 %v71, %v547
  %v602 = vadd.f32 %v72, %v550
  %v603 = vadd.f32 %v73, %v552
  %v604 = vadd.f32 %v74, %v555
  %v605 = vadd.f32 %v75, %v557
  %v606 = vadd.f32 %v76, %v560
  %v607 = vadd.f32 %v77, %v562
  %v608 = vadd.f32 %v78, %v565
  %v609 = vadd.f32 %v79, %v567
  %v610 = vadd.f32 %v80, %v570
  %v611 = vadd.f32 %v81, %v572
  %v612 = vadd.f32 %v82, %v575
  %v613 = vadd.f32 %v83, %v577
  %v614 = vadd.f32 %v84, %v580
  %v615 = vadd.f32 %v85, %v582
  %616 = vst [vmem:[#allocation2] sm:$0xff] %v584
  %617 = vst [vmem:[#allocation2 + $0x8] sm:$0xff] %v585
  %618 = vst [vmem:[#allocation2 + $0x10] sm:$0xff] %v586
  %619 = vst [vmem:[#allocation2 + $0x18] sm:$0xff] %v587
  %620 = vst [vmem:[#allocation2 + $0x20] sm:$0xff] %v588
  %621 = vst [vmem:[#allocation2 + $0x28] sm:$0xff] %v589
  %622 = vst [vmem:[#allocation2 + $0x30] sm:$0xff] %v590
  %623 = vst [vmem:[#allocation2 + $0x38] sm:$0xff] %v591
  %624 = vst [vmem:[#allocation2 + $0x40] sm:$0xff] %v592
  %625 = vst [vmem:[#allocation2 + $0x48] sm:$0xff] %v593
  %626 = vst [vmem:[#allocation2 + $0x50] sm:$0xff] %v594
  %627 = vst [vmem:[#allocation2 + $0x58] sm:$0xff] %v595
  %628 = vst [vmem:[#allocation2 + $0x60] sm:$0xff] %v596
  %629 = vst [vmem:[#allocation2 + $0x68] sm:$0xff] %v597
  %630 = vst [vmem:[#allocation2 + $0x70] sm:$0xff] %v598
  %631 = vst [vmem:[#allocation2 + $0x78] sm:$0xff] %v599
  %632 = vst [vmem:[#allocation2 + $0x80] sm:$0xff] %v600
  %633 = vst [vmem:[#allocation2 + $0x88] sm:$0xff] %v601
  %634 = vst [vmem:[#allocation2 + $0x90] sm:$0xff] %v602
  %635 = vst [vmem:[#allocation2 + $0x98] sm:$0xff] %v603
  %636 = vst [vmem:[#allocation2 + $0xa0] sm:$0xff] %v604
  %637 = vst [vmem:[#allocation2 + $0xa8] sm:$0xff] %v605
  %638 = vst [vmem:[#allocation2 + $0xb0] sm:$0xff] %v606
  %639 = vst [vmem:[#allocation2 + $0xb8] sm:$0xff] %v607
  %640 = vst [vmem:[#allocation2 + $0xc0] sm:$0xff] %v608
  %641 = vst [vmem:[#allocation2 + $0xc8] sm:$0xff] %v609
  %642 = vst [vmem:[#allocation2 + $0xd0] sm:$0xff] %v610
  %643 = vst [vmem:[#allocation2 + $0xd8] sm:$0xff] %v611
  %644 = vst [vmem:[#allocation2 + $0xe0] sm:$0xff] %v612
  %645 = vst [vmem:[#allocation2 + $0xe8] sm:$0xff] %v613
  %646 = vst [vmem:[#allocation2 + $0xf0] sm:$0xff] %v614
  %647 = vst [vmem:[#allocation2 + $0xf8] sm:$0xff] %v615
  // Predicated region
  $region18: #{graph_convolution.3} parent=0 // pred_check
    %p648 = pneg %p14
  $region19: #{graph_convolution.3} parent=0 // pred_check_branch
    %650 = sbr.rel (%p648) target = $region21
  $region20: #{graph_convolution.3} parent=0 // pred_region
    %v651 = vld [vmem:[#allocation2] sm:$0xff]
    %v652 = vld [vmem:[#allocation2 + $0x8] sm:$0xff]
    %v653 = vld [vmem:[#allocation2 + $0x10] sm:$0xff]
    %v654 = vld [vmem:[#allocation2 + $0x18] sm:$0xff]
    %v655 = vld [vmem:[#allocation2 + $0x20] sm:$0xff]
    %v656 = vld [vmem:[#allocation2 + $0x28] sm:$0xff]
    %v657 = vld [vmem:[#allocation2 + $0x30] sm:$0xff]
    %v658 = vld [vmem:[#allocation2 + $0x38] sm:$0xff]
    %v659 = vld [vmem:[#allocation2 + $0x40] sm:$0xff]
    %v660 = vld [vmem:[#allocation2 + $0x48] sm:$0xff]
    %v661 = vld [vmem:[#allocation2 + $0x50] sm:$0xff]
    %v662 = vld [vmem:[#allocation2 + $0x58] sm:$0xff]
    %v663 = vld [vmem:[#allocation2 + $0x60] sm:$0xff]
    %v664 = vld [vmem:[#allocation2 + $0x68] sm:$0xff]
    %v665 = vld [vmem:[#allocation2 + $0x70] sm:$0xff]
    %v666 = vld [vmem:[#allocation2 + $0x78] sm:$0xff]
    %v667 = vld [vmem:[#allocation2 + $0x80] sm:$0xff]
    %v668 = vld [vmem:[#allocation2 + $0x88] sm:$0xff]
    %v669 = vld [vmem:[#allocation2 + $0x90] sm:$0xff]
    %v670 = vld [vmem:[#allocation2 + $0x98] sm:$0xff]
    %v671 = vld [vmem:[#allocation2 + $0xa0] sm:$0xff]
    %v672 = vld [vmem:[#allocation2 + $0xa8] sm:$0xff]
    %v673 = vld [vmem:[#allocation2 + $0xb0] sm:$0xff]
    %v674 = vld [vmem:[#allocation2 + $0xb8] sm:$0xff]
    %v675 = vld [vmem:[#allocation2 + $0xc0] sm:$0xff]
    %v676 = vld [vmem:[#allocation2 + $0xc8] sm:$0xff]
    %v677 = vld [vmem:[#allocation2 + $0xd0] sm:$0xff]
    %v678 = vld [vmem:[#allocation2 + $0xd8] sm:$0xff]
    %v679 = vld [vmem:[#allocation2 + $0xe0] sm:$0xff]
    %v680 = vld [vmem:[#allocation2 + $0xe8] sm:$0xff]
    %v681 = vld [vmem:[#allocation2 + $0xf0] sm:$0xff]
    %v682 = vld [vmem:[#allocation2 + $0xf8] sm:$0xff]
    %683 = vst [vmem:[%s3] sm:$0xff] %v651
    %684 = vst [vmem:[%s3 + $0x8] sm:$0xff] %v652
    %685 = vst [vmem:[%s3 + $0x10] sm:$0xff] %v653
    %686 = vst [vmem:[%s3 + $0x18] sm:$0xff] %v654
    %687 = vst [vmem:[%s3 + $0x20] sm:$0xff] %v655
    %688 = vst [vmem:[%s3 + $0x28] sm:$0xff] %v656
    %689 = vst [vmem:[%s3 + $0x30] sm:$0xff] %v657
    %690 = vst [vmem:[%s3 + $0x38] sm:$0xff] %v658
    %691 = vst [vmem:[%s3 + $0x40] sm:$0xff] %v659
    %692 = vst [vmem:[%s3 + $0x48] sm:$0xff] %v660
    %693 = vst [vmem:[%s3 + $0x50] sm:$0xff] %v661
    %694 = vst [vmem:[%s3 + $0x58] sm:$0xff] %v662
    %695 = vst [vmem:[%s3 + $0x60] sm:$0xff] %v663
    %696 = vst [vmem:[%s3 + $0x68] sm:$0xff] %v664
    %697 = vst [vmem:[%s3 + $0x70] sm:$0xff] %v665
    %698 = vst [vmem:[%s3 + $0x78] sm:$0xff] %v666
    %699 = vst [vmem:[%s3 + $0x80] sm:$0xff] %v667
    %700 = vst [vmem:[%s3 + $0x88] sm:$0xff] %v668
    %701 = vst [vmem:[%s3 + $0x90] sm:$0xff] %v669
    %702 = vst [vmem:[%s3 + $0x98] sm:$0xff] %v670
    %703 = vst [vmem:[%s3 + $0xa0] sm:$0xff] %v671
    %704 = vst [vmem:[%s3 + $0xa8] sm:$0xff] %v672
    %705 = vst [vmem:[%s3 + $0xb0] sm:$0xff] %v673
    %706 = vst [vmem:[%s3 + $0xb8] sm:$0xff] %v674
    %707 = vst [vmem:[%s3 + $0xc0] sm:$0xff] %v675
    %708 = vst [vmem:[%s3 + $0xc8] sm:$0xff] %v676
    %709 = vst [vmem:[%s3 + $0xd0] sm:$0xff] %v677
    %710 = vst [vmem:[%s3 + $0xd8] sm:$0xff] %v678
    %711 = vst [vmem:[%s3 + $0xe0] sm:$0xff] %v679
    %712 = vst [vmem:[%s3 + $0xe8] sm:$0xff] %v680
    %713 = vst [vmem:[%s3 + $0xf0] sm:$0xff] %v681
    %714 = vst [vmem:[%s3 + $0xf8] sm:$0xff] %v682
  $region21: #{graph_convolution.3} parent=0 // pred_fallthru
    _
  // Predicated region
  $region22: #{graph_convolution.3} parent=0 // pred_check
    _
  $region23: #{graph_convolution.3} parent=0 // pred_check_branch
    %716 = sbr.rel (0) target = $region25
  $region24: #{graph_convolution.3} parent=0 // pred_region
    _
  $region25: #{graph_convolution.3} parent=0 // pred_fallthru
    _
  // Predicated region
  $region26: #{graph_convolution.3} parent=0 // pred_check
    _
  $region27: #{graph_convolution.3} parent=0 // pred_check_branch
    %718 = sbr.rel (0) target = $region29
  $region28: #{graph_convolution.3} parent=0 // pred_region
    _
  $region29: #{graph_convolution.3} parent=0 // pred_fallthru
    _

// kernel: graph_convolution.2
$region0: #{graph_convolution.2}
  #allocation0 [shape = 'u32[]', space=smem, size = 0x4, offset = 0x4, fixed_abs, tag = 'smem constant byte address 0x4 - core index']
  #allocation1 [shape = 'u32[72,128]{1,0:T(1,128)}', space=vmem, size = 0x9000, scoped, tag = 'internal scratch']
  %s0 = inlined_call_operand.vmem [shape: bf16[256,64], index: 0, kind: input, shape index: {}]
  %s1 = inlined_call_operand.vmem [shape: bf16[64,128], index: 1, kind: input, shape index: {}]
  %s2 = inlined_call_operand.vmem [shape: bf16[256,128], index: 2, kind: output, shape index: {}]
  %s3 = sld [smem:[#allocation0]]
  $region18: #{graph_convolution.2} parent=0
    _
  %s5 = ssub.s32 1, %s3
  %s6 = scalar_select 0, %s5, %s3
  // Predicated region
  $region2: #{graph_convolution.2} parent=0 // pred_check
    _
  $region3: #{graph_convolution.2} parent=0 // pred_check_branch
    %8 = sbr.rel (0) target = $region5
  $region4: #{graph_convolution.2} parent=0 // pred_region
    _
  $region5: #{graph_convolution.2} parent=0 // pred_fallthru
    _
  // Predicated region
  $region6: #{graph_convolution.2} parent=0 // pred_check
    _
  $region7: #{graph_convolution.2} parent=0 // pred_check_branch
    %10 = sbr.rel (0) target = $region9
  $region8: #{graph_convolution.2} parent=0 // pred_region
    _
  $region9: #{graph_convolution.2} parent=0 // pred_fallthru
    _
  %v12 = vld [vmem:[%s0] sm:$0xf]
  %v13 = vld [vmem:[%s0 + $0x4] sm:$0xf]
  %v14 = vld [vmem:[%s0 + $0x8] sm:$0xf]
  %v15 = vld [vmem:[%s0 + $0xc] sm:$0xf]
  %v16 = vld [vmem:[%s0 + $0x10] sm:$0xf]
  %v17 = vld [vmem:[%s0 + $0x14] sm:$0xf]
  %v18 = vld [vmem:[%s0 + $0x18] sm:$0xf]
  %v19 = vld [vmem:[%s0 + $0x1c] sm:$0xf]
  %v20 = vld [vmem:[%s0 + $0x20] sm:$0xf]
  %v21 = vld [vmem:[%s0 + $0x24] sm:$0xf]
  %v22 = vld [vmem:[%s0 + $0x28] sm:$0xf]
  %v23 = vld [vmem:[%s0 + $0x2c] sm:$0xf]
  %v24 = vld [vmem:[%s0 + $0x30] sm:$0xf]
  %v25 = vld [vmem:[%s0 + $0x34] sm:$0xf]
  %v26 = vld [vmem:[%s0 + $0x38] sm:$0xf]
  %v27 = vld [vmem:[%s0 + $0x3c] sm:$0xf]
  %v28 = vld [vmem:[%s0 + $0x40] sm:$0xf]
  %v29 = vld [vmem:[%s0 + $0x44] sm:$0xf]
  %v30 = vld [vmem:[%s0 + $0x48] sm:$0xf]
  %v31 = vld [vmem:[%s0 + $0x4c] sm:$0xf]
  %v32 = vld [vmem:[%s0 + $0x50] sm:$0xf]
  %v33 = vld [vmem:[%s0 + $0x54] sm:$0xf]
  %v34 = vld [vmem:[%s0 + $0x58] sm:$0xf]
  %v35 = vld [vmem:[%s0 + $0x5c] sm:$0xf]
  %v36 = vld [vmem:[%s0 + $0x60] sm:$0xf]
  %v37 = vld [vmem:[%s0 + $0x64] sm:$0xf]
  %v38 = vld [vmem:[%s0 + $0x68] sm:$0xf]
  %v39 = vld [vmem:[%s0 + $0x6c] sm:$0xf]
  %v40 = vld [vmem:[%s0 + $0x70] sm:$0xf]
  %v41 = vld [vmem:[%s0 + $0x74] sm:$0xf]
  %v42 = vld [vmem:[%s0 + $0x78] sm:$0xf]
  %v43 = vld [vmem:[%s0 + $0x7c] sm:$0xf]
  %v44 = vld [vmem:[%s1] sm:$0xf]
  %v45 = vld [vmem:[%s1 + $0x4] sm:$0xf]
  %v46 = vld [vmem:[%s1 + $0x8] sm:$0xf]
  %v47 = vld [vmem:[%s1 + $0xc] sm:$0xf]
  %v48 = vld [vmem:[%s1 + $0x10] sm:$0xf]
  %v49 = vld [vmem:[%s1 + $0x14] sm:$0xf]
  %v50 = vld [vmem:[%s1 + $0x18] sm:$0xf]
  %v51 = vld [vmem:[%s1 + $0x1c] sm:$0xf]
  %v84 = vunpack.c.l.b16 %v12
  %v85 = vunpack.c.l.b16 %v13
  %v86 = vunpack.c.l.b16 %v14
  %v87 = vunpack.c.l.b16 %v15
  %v88 = vunpack.c.l.b16 %v16
  %v89 = vunpack.c.l.b16 %v17
  %v90 = vunpack.c.l.b16 %v18
  %v91 = vunpack.c.l.b16 %v19
  %v92 = vunpack.c.l.b16 %v20
  %v93 = vunpack.c.l.b16 %v21
  %v94 = vunpack.c.l.b16 %v22
  %v95 = vunpack.c.l.b16 %v23
  %v96 = vunpack.c.l.b16 %v24
  %v97 = vunpack.c.l.b16 %v25
  %v98 = vunpack.c.l.b16 %v26
  %v99 = vunpack.c.l.b16 %v27
  %v100 = vunpack.c.l.b16 %v28
  %v101 = vunpack.c.l.b16 %v29
  %v102 = vunpack.c.l.b16 %v30
  %v103 = vunpack.c.l.b16 %v31
  %v104 = vunpack.c.l.b16 %v32
  %v105 = vunpack.c.l.b16 %v33
  %v106 = vunpack.c.l.b16 %v34
  %v107 = vunpack.c.l.b16 %v35
  %v108 = vunpack.c.l.b16 %v36
  %v109 = vunpack.c.l.b16 %v37
  %v110 = vunpack.c.l.b16 %v38
  %v111 = vunpack.c.l.b16 %v39
  %v112 = vunpack.c.l.b16 %v40
  %v113 = vunpack.c.l.b16 %v41
  %v114 = vunpack.c.l.b16 %v42
  %v115 = vunpack.c.l.b16 %v43
  %v116 = vpack.c.b16 %v85, %v84
  %v117 = vpack.c.b16 %v87, %v86
  %v118 = vpack.c.b16 %v89, %v88
  %v119 = vpack.c.b16 %v91, %v90
  %v120 = vpack.c.b16 %v93, %v92
  %v121 = vpack.c.b16 %v95, %v94
  %v122 = vpack.c.b16 %v97, %v96
  %v123 = vpack.c.b16 %v99, %v98
  %v124 = vpack.c.b16 %v101, %v100
  %v125 = vpack.c.b16 %v103, %v102
  %v126 = vpack.c.b16 %v105, %v104
  %v127 = vpack.c.b16 %v107, %v106
  %v128 = vpack.c.b16 %v109, %v108
  %v129 = vpack.c.b16 %v111, %v110
  %v130 = vpack.c.b16 %v113, %v112
  %v131 = vpack.c.b16 %v115, %v114
  %v140 = vunpack.c.l.b16 %v44
  %v141 = vunpack.c.l.b16 %v45
  %v142 = vunpack.c.l.b16 %v46
  %v143 = vunpack.c.l.b16 %v47
  %v144 = vunpack.c.l.b16 %v48
  %v145 = vunpack.c.l.b16 %v49
  %v146 = vunpack.c.l.b16 %v50
  %v147 = vunpack.c.l.b16 %v51
  %v148 = vpack.c.b16 %v141, %v140
  %v149 = vpack.c.b16 %v143, %v142
  %v150 = vpack.c.b16 %v145, %v144
  %v151 = vpack.c.b16 %v147, %v146
  %vm156 = vcmask 523264
  %v158 = vsel %vm156, %v116, 0
  %v161 = vsel %vm156, %v117, 0
  %v164 = vsel %vm156, %v118, 0
  %v167 = vsel %vm156, %v119, 0
  %v170 = vsel %vm156, %v120, 0
  %v173 = vsel %vm156, %v121, 0
  %v176 = vsel %vm156, %v122, 0
  %v179 = vsel %vm156, %v123, 0
  %v182 = vsel %vm156, %v124, 0
  %v185 = vsel %vm156, %v125, 0
  %v188 = vsel %vm156, %v126, 0
  %v191 = vsel %vm156, %v127, 0
  %v194 = vsel %vm156, %v128, 0
  %v197 = vsel %vm156, %v129, 0
  %v200 = vsel %vm156, %v130, 0
  %v203 = vsel %vm156, %v131, 0
  %205 = vmatpush.bf16.msra.mxu0 0
  %206 = vmatpush.bf16.msra.mxu0 0
  %207 = vmatpush.bf16.msra.mxu0 0
  %208 = vmatpush.bf16.msra.mxu0 0
  %209 = vmatpush.bf16.msra.mxu0 %v151
  %210 = vmatpush.bf16.msra.mxu0 %v150
  %211 = vmatpush.bf16.msra.mxu0 %v149
  %212 = vmatpush.bf16.msra.mxu0 %v148
  %213 = vmatmul.bf16.gmra.mxu0 %v158
  %v214 = vpop.f32.mrf.mxu0
  %v215 = vadd.f32 0.0, %v214
  %v216 = vpop.f32.mrf.mxu0
  %v217 = vadd.f32 0.0, %v216
  %218 = vmatmul.bf16.gmra.mxu0 %v161
  %v219 = vpop.f32.mrf.mxu0
  %v220 = vadd.f32 0.0, %v219
  %v221 = vpop.f32.mrf.mxu0
  %v222 = vadd.f32 0.0, %v221
  %223 = vmatmul.bf16.gmra.mxu0 %v164
  %v224 = vpop.f32.mrf.mxu0
  %v225 = vadd.f32 0.0, %v224
  %v226 = vpop.f32.mrf.mxu0
  %v227 = vadd.f32 0.0, %v226
  %228 = vmatmul.bf16.gmra.mxu0 %v167
  %v229 = vpop.f32.mrf.mxu0
  %v230 = vadd.f32 0.0, %v229
  %v231 = vpop.f32.mrf.mxu0
  %v232 = vadd.f32 0.0, %v231
  %233 = vmatmul.bf16.gmra.mxu0 %v170
  %v234 = vpop.f32.mrf.mxu0
  %v235 = vadd.f32 0.0, %v234
  %v236 = vpop.f32.mrf.mxu0
  %v237 = vadd.f32 0.0, %v236
  %238 = vmatmul.bf16.gmra.mxu0 %v173
  %v239 = vpop.f32.mrf.mxu0
  %v240 = vadd.f32 0.0, %v239
  %v241 = vpop.f32.mrf.mxu0
  %v242 = vadd.f32 0.0, %v241
  %243 = vmatmul.bf16.gmra.mxu0 %v176
  %v244 = vpop.f32.mrf.mxu0
  %v245 = vadd.f32 0.0, %v244
  %v246 = vpop.f32.mrf.mxu0
  %v247 = vadd.f32 0.0, %v246
  %248 = vmatmul.bf16.gmra.mxu0 %v179
  %v249 = vpop.f32.mrf.mxu0
  %v250 = vadd.f32 0.0, %v249
  %v251 = vpop.f32.mrf.mxu0
  %v252 = vadd.f32 0.0, %v251
  %253 = vmatmul.bf16.gmra.mxu0 %v182
  %v254 = vpop.f32.mrf.mxu0
  %v255 = vadd.f32 0.0, %v254
  %v256 = vpop.f32.mrf.mxu0
  %v257 = vadd.f32 0.0, %v256
  %258 = vmatmul.bf16.gmra.mxu0 %v185
  %v259 = vpop.f32.mrf.mxu0
  %v260 = vadd.f32 0.0, %v259
  %v261 = vpop.f32.mrf.mxu0
  %v262 = vadd.f32 0.0, %v261
  %263 = vmatmul.bf16.gmra.mxu0 %v188
  %v264 = vpop.f32.mrf.mxu0
  %v265 = vadd.f32 0.0, %v264
  %v266 = vpop.f32.mrf.mxu0
  %v267 = vadd.f32 0.0, %v266
  %268 = vmatmul.bf16.gmra.mxu0 %v191
  %v269 = vpop.f32.mrf.mxu0
  %v270 = vadd.f32 0.0, %v269
  %v271 = vpop.f32.mrf.mxu0
  %v272 = vadd.f32 0.0, %v271
  %273 = vmatmul.bf16.gmra.mxu0 %v194
  %v274 = vpop.f32.mrf.mxu0
  %v275 = vadd.f32 0.0, %v274
  %v276 = vpop.f32.mrf.mxu0
  %v277 = vadd.f32 0.0, %v276
  %278 = vmatmul.bf16.gmra.mxu0 %v197
  %v279 = vpop.f32.mrf.mxu0
  %v280 = vadd.f32 0.0, %v279
  %v281 = vpop.f32.mrf.mxu0
  %v282 = vadd.f32 0.0, %v281
  %283 = vmatmul.bf16.gmra.mxu0 %v200
  %v284 = vpop.f32.mrf.mxu0
  %v285 = vadd.f32 0.0, %v284
  %v286 = vpop.f32.mrf.mxu0
  %v287 = vadd.f32 0.0, %v286
  %288 = vmatmul.bf16.gmra.mxu0 %v203
  %v289 = vpop.f32.mrf.mxu0
  %v290 = vadd.f32 0.0, %v289
  %v291 = vpop.f32.mrf.mxu0
  %v292 = vadd.f32 0.0, %v291
  %293 = vdwg.mxu0
  %v294 = vpack.c.bf16 %v215, %v215
  %v295 = vpack.c.bf16 %v217, %v217
  %v296 = vpack.c.bf16 %v220, %v220
  %v297 = vpack.c.bf16 %v222, %v222
  %v298 = vpack.c.bf16 %v225, %v225
  %v299 = vpack.c.bf16 %v227, %v227
  %v300 = vpack.c.bf16 %v230, %v230
  %v301 = vpack.c.bf16 %v232, %v232
  %v302 = vpack.c.bf16 %v235, %v235
  %v303 = vpack.c.bf16 %v237, %v237
  %v304 = vpack.c.bf16 %v240, %v240
  %v305 = vpack.c.bf16 %v242, %v242
  %v306 = vpack.c.bf16 %v245, %v245
  %v307 = vpack.c.bf16 %v247, %v247
  %v308 = vpack.c.bf16 %v250, %v250
  %v309 = vpack.c.bf16 %v252, %v252
  %v310 = vpack.c.bf16 %v255, %v255
  %v311 = vpack.c.bf16 %v257, %v257
  %v312 = vpack.c.bf16 %v260, %v260
  %v313 = vpack.c.bf16 %v262, %v262
  %v314 = vpack.c.bf16 %v265, %v265
  %v315 = vpack.c.bf16 %v267, %v267
  %v316 = vpack.c.bf16 %v270, %v270
  %v317 = vpack.c.bf16 %v272, %v272
  %v318 = vpack.c.bf16 %v275, %v275
  %v319 = vpack.c.bf16 %v277, %v277
  %v320 = vpack.c.bf16 %v280, %v280
  %v321 = vpack.c.bf16 %v282, %v282
  %v322 = vpack.c.bf16 %v285, %v285
  %v323 = vpack.c.bf16 %v287, %v287
  %v324 = vpack.c.bf16 %v290, %v290
  %v325 = vpack.c.bf16 %v292, %v292
  %326 = vst [vmem:[%s2] sm:$0xf] %v294
  %327 = vst [vmem:[%s2 + $0x4] sm:$0xf] %v295
  %328 = vst [vmem:[%s2 + $0x8] sm:$0xf] %v296
  %329 = vst [vmem:[%s2 + $0xc] sm:$0xf] %v297
  %330 = vst [vmem:[%s2 + $0x10] sm:$0xf] %v298
  %331 = vst [vmem:[%s2 + $0x14] sm:$0xf] %v299
  %332 = vst [vmem:[%s2 + $0x18] sm:$0xf] %v300
  %333 = vst [vmem:[%s2 + $0x1c] sm:$0xf] %v301
  %334 = vst [vmem:[%s2 + $0x20] sm:$0xf] %v302
  %335 = vst [vmem:[%s2 + $0x24] sm:$0xf] %v303
  %336 = vst [vmem:[%s2 + $0x28] sm:$0xf] %v304
  %337 = vst [vmem:[%s2 + $0x2c] sm:$0xf] %v305
  %338 = vst [vmem:[%s2 + $0x30] sm:$0xf] %v306
  %339 = vst [vmem:[%s2 + $0x34] sm:$0xf] %v307
  %340 = vst [vmem:[%s2 + $0x38] sm:$0xf] %v308
  %341 = vst [vmem:[%s2 + $0x3c] sm:$0xf] %v309
  %342 = vst [vmem:[%s2 + $0x40] sm:$0xf] %v310
  %343 = vst [vmem:[%s2 + $0x44] sm:$0xf] %v311
  %344 = vst [vmem:[%s2 + $0x48] sm:$0xf] %v312
  %345 = vst [vmem:[%s2 + $0x4c] sm:$0xf] %v313
  %346 = vst [vmem:[%s2 + $0x50] sm:$0xf] %v314
  %347 = vst [vmem:[%s2 + $0x54] sm:$0xf] %v315
  %348 = vst [vmem:[%s2 + $0x58] sm:$0xf] %v316
  %349 = vst [vmem:[%s2 + $0x5c] sm:$0xf] %v317
  %350 = vst [vmem:[%s2 + $0x60] sm:$0xf] %v318
  %351 = vst [vmem:[%s2 + $0x64] sm:$0xf] %v319
  %352 = vst [vmem:[%s2 + $0x68] sm:$0xf] %v320
  %353 = vst [vmem:[%s2 + $0x6c] sm:$0xf] %v321
  %354 = vst [vmem:[%s2 + $0x70] sm:$0xf] %v322
  %355 = vst [vmem:[%s2 + $0x74] sm:$0xf] %v323
  %356 = vst [vmem:[%s2 + $0x78] sm:$0xf] %v324
  %357 = vst [vmem:[%s2 + $0x7c] sm:$0xf] %v325
  // Predicated region
  $region10: #{graph_convolution.2} parent=0 // pred_check
    _
  $region11: #{graph_convolution.2} parent=0 // pred_check_branch
    %359 = sbr.rel (0) target = $region13
  $region12: #{graph_convolution.2} parent=0 // pred_region
    _
  $region13: #{graph_convolution.2} parent=0 // pred_fallthru
    _
  // Predicated region
  $region14: #{graph_convolution.2} parent=0 // pred_check
    _
  $region15: #{graph_convolution.2} parent=0 // pred_check_branch
    %361 = sbr.rel (0) target = $region17
  $region16: #{graph_convolution.2} parent=0 // pred_region
    _
  $region17: #{graph_convolution.2} parent=0 // pred_fallthru
    _

</llo_original>
